<compile_context>
chip_gen: v6e
topology: v6e:2x2x1
jax: 0.10.0
libtpu: 0.0.40
codegen_flags: <defaults>
</compile_context>

<pallas_src>
import jax
import jax.numpy as jnp
from jax.experimental import pallas as pl
from jax.experimental.pallas import tpu as pltpu


# ----------------------------- Pallas kernel -----------------------------

def _normal_head_kernel(x_ref,
                        w1_ref, b1_ref, s1_ref, t1_ref,
                        w2_ref, b2_ref, s2_ref, t2_ref,
                        w3_ref, b3_ref,
                        o1_ref, o2_ref, o3_ref):
    x = x_ref[...]                                                    # (Cin, tT) bf16

    # conv1 (1x1): (c1, Cin)bf16 @ (Cin, tT)bf16 -> f32 accumulate.  Output #1 (pre-BN, f32).
    h1 = jnp.dot(w1_ref[...], x, preferred_element_type=jnp.float32) + b1_ref[...]
    o1_ref[...] = h1

    # bn1 (folded per-channel scale/shift) + relu, then conv2 (bf16 operands, f32 acc).
    a1 = jnp.maximum(h1 * s1_ref[...] + t1_ref[...], 0.0)
    h2 = jnp.dot(w2_ref[...], a1.astype(jnp.bfloat16),
                 preferred_element_type=jnp.float32) + b2_ref[...]
    o2_ref[...] = h2                                                  # output #2 (pre-BN, f32)

    # bn2 + relu + conv3 (Cout=1): VPU multiply + sublane reduce (skip a 1-row MXU pass).
    a2 = jnp.maximum(h2 * s2_ref[...] + t2_ref[...], 0.0)
    h3 = jnp.sum(a2 * w3_ref[...], axis=0, keepdims=True) + b3_ref[...]   # (1, tT)
    o3_ref[...] = jax.nn.sigmoid(h3)


# ----------------------------- wrapper -----------------------------

def normal_head_forward(x, params, tile_t=2048):
    """x: (B, C, T) (PyTorch NCT).  Returns [o1, o2, o3] in NCT layout, float32."""
    B, Cin, T = x.shape
    c1 = params["w1"].shape[0]
    c2 = params["w2"].shape[0]

    # HBM-heavy operands in bf16 (f32 accumulation in-kernel); everything else stays f32.
    x_bf = x.astype(jnp.bfloat16)
    w1 = params["w1"].astype(jnp.bfloat16)
    w2 = params["w2"].astype(jnp.bfloat16)

    # Time tiling: lane-dense tiles (multiple of 128) when T is large; full-T block otherwise.
    # Ragged tails are handled by Pallas's masked tail block -- no jnp.pad / output slicing.
    if T >= tile_t:
        tT = tile_t
    else:
        tT = T
    n_t = pl.cdiv(T, tT)

    # v7x megacore: ensure the parallel grid has at least 2 steps when possible.
    if B * n_t < 2 and T >= 256:
        tT = ((T + 255) // 256) * 128          # ~T/2 rounded to a 128-lane multiple
        n_t = pl.cdiv(T, tT)

    grid = (B, n_t)

    def w_spec(arr):
        # Constant index_map -> weights stay resident in VMEM across the whole grid.
        return pl.BlockSpec(arr.shape, lambda b, t: (0, 0))

    out_shapes = (
        jax.ShapeDtypeStruct((B, c1, T), jnp.float32),
        jax.ShapeDtypeStruct((B, c2, T), jnp.float32),
        jax.ShapeDtypeStruct((B, 1, T), jnp.float32),
    )

    o1, o2, o3 = pl.pallas_call(
        _normal_head_kernel,
        out_shape=out_shapes,
        grid_spec=pltpu.PrefetchScalarGridSpec(
            num_scalar_prefetch=0,
            grid=grid,
            in_specs=[
                pl.BlockSpec((None, Cin, tT), lambda b, t: (b, 0, t)),   # x (batch squeezed)
                w_spec(w1), w_spec(params["b1"]),
                w_spec(params["s1"]), w_spec(params["t1"]),
                w_spec(w2), w_spec(params["b2"]),
                w_spec(params["s2"]), w_spec(params["t2"]),
                w_spec(params["w3"]), w_spec(params["b3"]),
            ],
            out_specs=[
                pl.BlockSpec((None, c1, tT), lambda b, t: (b, 0, t)),
                pl.BlockSpec((None, c2, tT), lambda b, t: (b, 0, t)),
                pl.BlockSpec((None, 1, tT), lambda b, t: (b, 0, t)),
            ],
        ),
        compiler_params=pltpu.CompilerParams(
            dimension_semantics=("parallel", "parallel"),
        ),
    )(x_bf,
      w1, params["b1"], params["s1"], params["t1"],
      w2, params["b2"], params["s2"], params["t2"],
      params["w3"], params["b3"])

    return [o1, o2, o3]


# ----------------------------- params (deterministic, synthetic) -----------------------------

def init_params(key, in_channel=512, ratios=(16, 32), eps=1e-5):
    c1 = in_channel // ratios[0]
    c2 = in_channel // ratios[1]
    ks = jax.random.split(key, 14)

    # Conv1d weights (kernel_size=1) stored as (Cout, Cin) for left-multiply in NCT layout.
    w1 = 0.05 * jax.random.normal(ks[0], (c1, in_channel), jnp.float32)
    b1 = 0.05 * jax.random.normal(ks[1], (c1, 1), jnp.float32)
    w2 = 0.10 * jax.random.normal(ks[2], (c2, c1), jnp.float32)
    b2 = 0.10 * jax.random.normal(ks[3], (c2, 1), jnp.float32)
    w3 = 0.10 * jax.random.normal(ks[4], (c2, 1), jnp.float32)   # conv3 weight as (Cin, 1)
    b3 = 0.10 * jax.random.normal(ks[5], (1, 1), jnp.float32)

    # BatchNorm1d (eval mode) params folded into per-channel scale/shift, shape (C, 1).
    g1 = 1.0 + 0.1 * jax.random.normal(ks[6], (c1, 1), jnp.float32)
    be1 = 0.1 * jax.random.normal(ks[7], (c1, 1), jnp.float32)
    m1 = 0.1 * jax.random.normal(ks[8], (c1, 1), jnp.float32)
    v1 = 1.0 + 0.1 * jnp.abs(jax.random.normal(ks[9], (c1, 1), jnp.float32))
    g2 = 1.0 + 0.1 * jax.random.normal(ks[10], (c2, 1), jnp.float32)
    be2 = 0.1 * jax.random.normal(ks[11], (c2, 1), jnp.float32)
    m2 = 0.1 * jax.random.normal(ks[12], (c2, 1), jnp.float32)
    v2 = 1.0 + 0.1 * jnp.abs(jax.random.normal(ks[13], (c2, 1), jnp.float32))

    s1 = g1 / jnp.sqrt(v1 + eps)
    t1 = be1 - m1 * s1
    s2 = g2 / jnp.sqrt(v2 + eps)
    t2 = be2 - m2 * s2

    return dict(w1=w1, b1=b1, s1=s1, t1=t1,
                w2=w2, b2=b2, s2=s2, t2=t2,
                w3=w3, b3=b3)


# ----------------------------- pure-JAX reference -----------------------------

def normal_head_ref(x, p):
    h1 = jnp.einsum("oc,bct->bot", p["w1"], x) + p["b1"][None]
    a1 = jnp.maximum(h1 * p["s1"][None] + p["t1"][None], 0.0)
    h2 = jnp.einsum("oc,bct->bot", p["w2"], a1) + p["b2"][None]
    a2 = jnp.maximum(h2 * p["s2"][None] + p["t2"][None], 0.0)
    h3 = jax.nn.sigmoid(jnp.sum(a2 * p["w3"][None], axis=1, keepdims=True) + p["b3"][None])
    return [h1, h2, h3]


# ----------------------------- main -----------------------------

if __name__ == "__main__":
    in_channel = 512   # module default; ratios [16, 32] -> 32- and 16-channel intermediates
    B, T = 2, 16

    key = jax.random.PRNGKey(0)
    k_params, k_x = jax.random.split(key)
    params = init_params(k_params, in_channel=in_channel)
    x = jax.random.normal(k_x, (B, in_channel, T), jnp.float32)   # BN * C * T

    outs = jax.block_until_ready(normal_head_forward(x, params))
    refs = normal_head_ref(x, params)

    assert outs[0].shape == (B, in_channel // 16, T)
    assert outs[1].shape == (B, in_channel // 32, T)
    assert outs[2].shape == (B, 1, T)
    # bf16 inputs with f32 accumulation -> ~1e-2 tolerance (no systematic bias).
    for o, r in zip(outs, refs):
        assert jnp.allclose(o, r, atol=2e-2, rtol=2e-2)

    print("KERNEL_OK")
</pallas_src>

<mosaic_0001>
module attributes {stable_mosaic.version = 11 : i64} {
  func.func @_normal_head_kernel(%arg0: i32, %arg1: i32, %arg2: memref<1x512x16xbf16, #tpu.memory_space<vmem>>, %arg3: memref<32x512xbf16, #tpu.memory_space<vmem>>, %arg4: memref<32x1xf32, #tpu.memory_space<vmem>>, %arg5: memref<32x1xf32, #tpu.memory_space<vmem>>, %arg6: memref<32x1xf32, #tpu.memory_space<vmem>>, %arg7: memref<16x32xbf16, #tpu.memory_space<vmem>>, %arg8: memref<16x1xf32, #tpu.memory_space<vmem>>, %arg9: memref<16x1xf32, #tpu.memory_space<vmem>>, %arg10: memref<16x1xf32, #tpu.memory_space<vmem>>, %arg11: memref<16x1xf32, #tpu.memory_space<vmem>>, %arg12: memref<1x1xf32, #tpu.memory_space<vmem>>, %arg13: memref<1x32x16xf32, #tpu.memory_space<vmem>>, %arg14: memref<1x16x16xf32, #tpu.memory_space<vmem>>, %arg15: memref<1x1x16xf32, #tpu.memory_space<vmem>>) attributes {dimension_semantics = [#tpu.dimension_semantics<parallel>, #tpu.dimension_semantics<parallel>], iteration_bounds = array<i64: 2, 1>, scalar_prefetch = 0 : i64, scratch_operands = 0 : i64, tpu.core_type = #tpu.core_type<tc>, window_params = [{transform_indices = @transform_0, window_bounds = array<i64: 1, 512, 16>}, {pipeline_mode = #tpu.pipeline_mode<synchronous>, transform_indices = @transform_1, window_bounds = array<i64: 32, 512>}, {pipeline_mode = #tpu.pipeline_mode<synchronous>, transform_indices = @transform_2, window_bounds = array<i64: 32, 1>}, {pipeline_mode = #tpu.pipeline_mode<synchronous>, transform_indices = @transform_3, window_bounds = array<i64: 32, 1>}, {pipeline_mode = #tpu.pipeline_mode<synchronous>, transform_indices = @transform_4, window_bounds = array<i64: 32, 1>}, {pipeline_mode = #tpu.pipeline_mode<synchronous>, transform_indices = @transform_5, window_bounds = array<i64: 16, 32>}, {pipeline_mode = #tpu.pipeline_mode<synchronous>, transform_indices = @transform_6, window_bounds = array<i64: 16, 1>}, {pipeline_mode = #tpu.pipeline_mode<synchronous>, transform_indices = @transform_7, window_bounds = array<i64: 16, 1>}, {pipeline_mode = #tpu.pipeline_mode<synchronous>, transform_indices = @transform_8, window_bounds = array<i64: 16, 1>}, {pipeline_mode = #tpu.pipeline_mode<synchronous>, transform_indices = @transform_9, window_bounds = array<i64: 16, 1>}, {pipeline_mode = #tpu.pipeline_mode<synchronous>, transform_indices = @transform_10, window_bounds = array<i64: 1, 1>}, {transform_indices = @transform_11, window_bounds = array<i64: 1, 32, 16>}, {transform_indices = @transform_12, window_bounds = array<i64: 1, 16, 16>}, {transform_indices = @transform_13, window_bounds = array<i64: 1, 1, 16>}]} {
    %c0 = arith.constant 0 : index
    %c0_0 = arith.constant 0 : index
    %c0_1 = arith.constant 0 : index
    %0 = vector.load %arg2[%c0, %c0_0, %c0_1] : memref<1x512x16xbf16, #tpu.memory_space<vmem>>, vector<1x512x16xbf16>
    %1 = vector.shape_cast %0 : vector<1x512x16xbf16> to vector<512x16xbf16>
    %c0_2 = arith.constant 0 : index
    %c0_3 = arith.constant 0 : index
    %2 = vector.load %arg3[%c0_2, %c0_3] : memref<32x512xbf16, #tpu.memory_space<vmem>>, vector<32x512xbf16>
    %cst = arith.constant dense<0.000000e+00> : vector<32x16xf32>
    %3 = tpu.matmul %2, %1, %cst {dimension_numbers = #tpu.dot_dimension_numbers<[1], [0], [0], [1], [0, 0, 1, 1], [], []>} : vector<32x512xbf16>, vector<512x16xbf16>, vector<32x16xf32> -> vector<32x16xf32>
    %c0_4 = arith.constant 0 : index
    %c0_5 = arith.constant 0 : index
    %4 = vector.load %arg4[%c0_4, %c0_5] : memref<32x1xf32, #tpu.memory_space<vmem>>, vector<32x1xf32>
    %5 = vector.broadcast %4 : vector<32x1xf32> to vector<32x16xf32>
    %6 = arith.addf %3, %5 : vector<32x16xf32>
    %c0_6 = arith.constant 0 : index
    %c0_7 = arith.constant 0 : index
    %c0_8 = arith.constant 0 : index
    %7 = vector.load %arg13[%c0_6, %c0_7, %c0_8] : memref<1x32x16xf32, #tpu.memory_space<vmem>>, vector<1x32x16xf32>
    %8 = vector.shape_cast %7 : vector<1x32x16xf32> to vector<32x16xf32>
    %9 = vector.shape_cast %6 : vector<32x16xf32> to vector<1x32x16xf32>
    tpu.vector_store %arg13[%c0_6, %c0_7, %c0_8], %9 {strides = array<i32>} : memref<1x32x16xf32, #tpu.memory_space<vmem>>, vector<1x32x16xf32>,
    %c0_9 = arith.constant 0 : index
    %c0_10 = arith.constant 0 : index
    %10 = vector.load %arg5[%c0_9, %c0_10] : memref<32x1xf32, #tpu.memory_space<vmem>>, vector<32x1xf32>
    %11 = vector.broadcast %10 : vector<32x1xf32> to vector<32x16xf32>
    %12 = arith.mulf %6, %11 : vector<32x16xf32>
    %c0_11 = arith.constant 0 : index
    %c0_12 = arith.constant 0 : index
    %13 = vector.load %arg6[%c0_11, %c0_12] : memref<32x1xf32, #tpu.memory_space<vmem>>, vector<32x1xf32>
    %14 = vector.broadcast %13 : vector<32x1xf32> to vector<32x16xf32>
    %15 = arith.addf %12, %14 : vector<32x16xf32>
    %cst_13 = arith.constant 0.000000e+00 : f32
    %16 = vector.broadcast %cst_13 : f32 to vector<32x16xf32>
    %17 = arith.maximumf %15, %16 : vector<32x16xf32>
    %c0_14 = arith.constant 0 : index
    %c0_15 = arith.constant 0 : index
    %18 = vector.load %arg7[%c0_14, %c0_15] : memref<16x32xbf16, #tpu.memory_space<vmem>>, vector<16x32xbf16>
    %19 = arith.truncf %17 : vector<32x16xf32> to vector<32x16xbf16>
    %cst_16 = arith.constant dense<0.000000e+00> : vector<16x16xf32>
    %20 = tpu.matmul %18, %19, %cst_16 {dimension_numbers = #tpu.dot_dimension_numbers<[1], [0], [0], [1], [0, 0, 1, 1], [], []>} : vector<16x32xbf16>, vector<32x16xbf16>, vector<16x16xf32> -> vector<16x16xf32>
    %c0_17 = arith.constant 0 : index
    %c0_18 = arith.constant 0 : index
    %21 = vector.load %arg8[%c0_17, %c0_18] : memref<16x1xf32, #tpu.memory_space<vmem>>, vector<16x1xf32>
    %22 = vector.broadcast %21 : vector<16x1xf32> to vector<16x16xf32>
    %23 = arith.addf %20, %22 : vector<16x16xf32>
    %c0_19 = arith.constant 0 : index
    %c0_20 = arith.constant 0 : index
    %c0_21 = arith.constant 0 : index
    %24 = vector.load %arg14[%c0_19, %c0_20, %c0_21] : memref<1x16x16xf32, #tpu.memory_space<vmem>>, vector<1x16x16xf32>
    %25 = vector.shape_cast %24 : vector<1x16x16xf32> to vector<16x16xf32>
    %26 = vector.shape_cast %23 : vector<16x16xf32> to vector<1x16x16xf32>
    tpu.vector_store %arg14[%c0_19, %c0_20, %c0_21], %26 {strides = array<i32>} : memref<1x16x16xf32, #tpu.memory_space<vmem>>, vector<1x16x16xf32>,
    %c0_22 = arith.constant 0 : index
    %c0_23 = arith.constant 0 : index
    %27 = vector.load %arg9[%c0_22, %c0_23] : memref<16x1xf32, #tpu.memory_space<vmem>>, vector<16x1xf32>
    %28 = vector.broadcast %27 : vector<16x1xf32> to vector<16x16xf32>
    %29 = arith.mulf %23, %28 : vector<16x16xf32>
    %c0_24 = arith.constant 0 : index
    %c0_25 = arith.constant 0 : index
    %30 = vector.load %arg10[%c0_24, %c0_25] : memref<16x1xf32, #tpu.memory_space<vmem>>, vector<16x1xf32>
    %31 = vector.broadcast %30 : vector<16x1xf32> to vector<16x16xf32>
    %32 = arith.addf %29, %31 : vector<16x16xf32>
    %cst_26 = arith.constant 0.000000e+00 : f32
    %33 = vector.broadcast %cst_26 : f32 to vector<16x16xf32>
    %34 = arith.maximumf %32, %33 : vector<16x16xf32>
    %c0_27 = arith.constant 0 : index
    %c0_28 = arith.constant 0 : index
    %35 = vector.load %arg11[%c0_27, %c0_28] : memref<16x1xf32, #tpu.memory_space<vmem>>, vector<16x1xf32>
    %36 = vector.broadcast %35 : vector<16x1xf32> to vector<16x16xf32>
    %37 = arith.mulf %34, %36 : vector<16x16xf32>
    %cst_29 = arith.constant dense<0.000000e+00> : vector<16xf32>
    %38 = vector.multi_reduction <add>, %37, %cst_29 [0] : vector<16x16xf32> to vector<16xf32>
    %39 = vector.shape_cast %38 : vector<16xf32> to vector<1x16xf32>
    %c0_30 = arith.constant 0 : index
    %c0_31 = arith.constant 0 : index
    %40 = vector.load %arg12[%c0_30, %c0_31] : memref<1x1xf32, #tpu.memory_space<vmem>>, vector<1x1xf32>
    %41 = vector.broadcast %40 : vector<1x1xf32> to vector<1x16xf32>
    %42 = arith.addf %39, %41 : vector<1x16xf32>
    %43 = arith.negf %42 : vector<1x16xf32>
    %44 = math.exp %43 : vector<1x16xf32>
    %cst_32 = arith.constant 1.000000e+00 : f32
    %45 = vector.broadcast %cst_32 : f32 to vector<1x16xf32>
    %46 = arith.addf %45, %44 : vector<1x16xf32>
    %47 = arith.divf %45, %46 : vector<1x16xf32>
    %c0_33 = arith.constant 0 : index
    %c0_34 = arith.constant 0 : index
    %c0_35 = arith.constant 0 : index
    %48 = vector.load %arg15[%c0_33, %c0_34, %c0_35] : memref<1x1x16xf32, #tpu.memory_space<vmem>>, vector<1x1x16xf32>
    %49 = vector.shape_cast %48 : vector<1x1x16xf32> to vector<1x16xf32>
    %50 = vector.shape_cast %47 : vector<1x16xf32> to vector<1x1x16xf32>
    tpu.vector_store %arg15[%c0_33, %c0_34, %c0_35], %50 {strides = array<i32>} : memref<1x1x16xf32, #tpu.memory_space<vmem>>, vector<1x1x16xf32>,
    return
  }
  func.func @transform_0(%arg0: i32, %arg1: i32) -> (i32, i32, i32) {
    %c0_i32 = arith.constant 0 : i32
    %c0_i32_0 = arith.constant 0 : i32
    return %arg0, %c0_i32, %arg1 : i32, i32, i32
  }
  func.func @transform_1(%arg0: i32, %arg1: i32) -> (i32, i32) {
    %c0_i32 = arith.constant 0 : i32
    %c0_i32_0 = arith.constant 0 : i32
    %c0_i32_1 = arith.constant 0 : i32
    return %c0_i32, %c0_i32_0 : i32, i32
  }
  func.func @transform_2(%arg0: i32, %arg1: i32) -> (i32, i32) {
    %c0_i32 = arith.constant 0 : i32
    %c0_i32_0 = arith.constant 0 : i32
    %c0_i32_1 = arith.constant 0 : i32
    return %c0_i32, %c0_i32_0 : i32, i32
  }
  func.func @transform_3(%arg0: i32, %arg1: i32) -> (i32, i32) {
    %c0_i32 = arith.constant 0 : i32
    %c0_i32_0 = arith.constant 0 : i32
    %c0_i32_1 = arith.constant 0 : i32
    return %c0_i32, %c0_i32_0 : i32, i32
  }
  func.func @transform_4(%arg0: i32, %arg1: i32) -> (i32, i32) {
    %c0_i32 = arith.constant 0 : i32
    %c0_i32_0 = arith.constant 0 : i32
    %c0_i32_1 = arith.constant 0 : i32
    return %c0_i32, %c0_i32_0 : i32, i32
  }
  func.func @transform_5(%arg0: i32, %arg1: i32) -> (i32, i32) {
    %c0_i32 = arith.constant 0 : i32
    %c0_i32_0 = arith.constant 0 : i32
    %c0_i32_1 = arith.constant 0 : i32
    return %c0_i32, %c0_i32_0 : i32, i32
  }
  func.func @transform_6(%arg0: i32, %arg1: i32) -> (i32, i32) {
    %c0_i32 = arith.constant 0 : i32
    %c0_i32_0 = arith.constant 0 : i32
    %c0_i32_1 = arith.constant 0 : i32
    return %c0_i32, %c0_i32_0 : i32, i32
  }
  func.func @transform_7(%arg0: i32, %arg1: i32) -> (i32, i32) {
    %c0_i32 = arith.constant 0 : i32
    %c0_i32_0 = arith.constant 0 : i32
    %c0_i32_1 = arith.constant 0 : i32
    return %c0_i32, %c0_i32_0 : i32, i32
  }
  func.func @transform_8(%arg0: i32, %arg1: i32) -> (i32, i32) {
    %c0_i32 = arith.constant 0 : i32
    %c0_i32_0 = arith.constant 0 : i32
    %c0_i32_1 = arith.constant 0 : i32
    return %c0_i32, %c0_i32_0 : i32, i32
  }
  func.func @transform_9(%arg0: i32, %arg1: i32) -> (i32, i32) {
    %c0_i32 = arith.constant 0 : i32
    %c0_i32_0 = arith.constant 0 : i32
    %c0_i32_1 = arith.constant 0 : i32
    return %c0_i32, %c0_i32_0 : i32, i32
  }
  func.func @transform_10(%arg0: i32, %arg1: i32) -> (i32, i32) {
    %c0_i32 = arith.constant 0 : i32
    %c0_i32_0 = arith.constant 0 : i32
    %c0_i32_1 = arith.constant 0 : i32
    return %c0_i32, %c0_i32_0 : i32, i32
  }
  func.func @transform_11(%arg0: i32, %arg1: i32) -> (i32, i32, i32) {
    %c0_i32 = arith.constant 0 : i32
    %c0_i32_0 = arith.constant 0 : i32
    return %arg0, %c0_i32, %arg1 : i32, i32, i32
  }
  func.func @transform_12(%arg0: i32, %arg1: i32) -> (i32, i32, i32) {
    %c0_i32 = arith.constant 0 : i32
    %c0_i32_0 = arith.constant 0 : i32
    return %arg0, %c0_i32, %arg1 : i32, i32, i32
  }
  func.func @transform_13(%arg0: i32, %arg1: i32) -> (i32, i32, i32) {
    %c0_i32 = arith.constant 0 : i32
    %c0_i32_0 = arith.constant 0 : i32
    return %arg0, %c0_i32, %arg1 : i32, i32, i32
  }
}

</mosaic_0001>

<llo_original>
// kernel: tpu_custom_call.1
$region0: #{tpu_custom_call.1}
  #allocation0 [shape = 'u32[]', space=smem, size = 0x4, offset = 0x4, fixed_abs, tag = 'smem constant byte address 0x4 - core index']
  #allocation1 [shape = 'u32[144,128]{1,0:T(1,128)}', space=vmem, size = 0x12000, scoped, tag = 'internal scratch']
  #allocation2 [shape = 'f32[1,1]{1,0:T(1,128)S(1)}', space=vmem, size = 0x200, scoped, tag = 'scoped memory for tpu_custom_call.1']
  %s0 = inlined_call_operand.vmem [shape: bf16[2,512,16], index: 0, kind: input, shape index: {}]
  %s1 = inlined_call_operand.vmem [shape: bf16[32,512], index: 1, kind: input, shape index: {}]
  %s2 = inlined_call_operand.vmem [shape: f32[32,1], index: 2, kind: input, shape index: {}]
  %s3 = inlined_call_operand.vmem [shape: f32[32,1], index: 3, kind: input, shape index: {}]
  %s4 = inlined_call_operand.vmem [shape: f32[32,1], index: 4, kind: input, shape index: {}]
  %s5 = inlined_call_operand.vmem [shape: bf16[16,32], index: 5, kind: input, shape index: {}]
  %s6 = inlined_call_operand.vmem [shape: f32[16,1], index: 6, kind: input, shape index: {}]
  %s7 = inlined_call_operand.vmem [shape: f32[16,1], index: 7, kind: input, shape index: {}]
  %s8 = inlined_call_operand.vmem [shape: f32[16,1], index: 8, kind: input, shape index: {}]
  %s9 = inlined_call_operand.vmem [shape: f32[16,1], index: 9, kind: input, shape index: {}]
  %s10 = inlined_call_operand.<no memory space> [shape: f32[1,1], index: 10, kind: input, shape index: {}]
  %s11 = inlined_call_operand.vmem [shape: f32[2,32,16], index: 11, kind: output, shape index: {0}]
  %s12 = inlined_call_operand.hbm [shape: f32[2,16,16], index: 12, kind: output, shape index: {1}]
  %s13 = inlined_call_operand.hbm [shape: f32[2,1,16], index: 13, kind: output, shape index: {2}]
  %14 = xla_tuple %s11, %s12, %s13
  %s15 = sld [smem:[#allocation0]]
  $region93: #{tpu_custom_call.1} parent=0
    _
  %s17 = ssub.s32 1, %s15
  %s18 = scalar_select 0, %s17, %s15
  %v19 = vstv %s10
  %20 = vst [vmem:[#allocation2] sm:$0x1] %v19
  $region1: #{tpu_custom_call.1} parent=0
    #allocation3 [shape = 'u8[16384]{0}', space=vmem, size = 0x4000, scoped, tag = 'output window, operand 1']
    #allocation4 [shape = 's32[2]{0}', space=sflag, size = 0x8, scoped, tag = 'scoped memory for tpu_custom_call.1']
    #allocation5 [shape = 'u8[1024]{0}', space=vmem, size = 0x400, scoped, tag = 'output window, operand 2']
    #allocation6 [shape = 's32[2]{0}', space=sflag, size = 0x8, scoped, tag = 'scoped memory for tpu_custom_call.1']
    %21 = vsyncpa [#allocation4], 0
    %s22 = scalar_lea.sflag [#allocation4], 1
    %23 = vsyncpa %s22, 0
    %24 = vsyncpa [#allocation6], 0
    %s25 = scalar_lea.sflag [#allocation6], 1
    %26 = vsyncpa %s25, 0
    loop: start=0, step=1, limit=4
    $region2: #{tpu_custom_call.1} parent=1 // loop_pre_header
      _
    $region3: #{tpu_custom_call.1} parent=1 // loop_header
      %s28 = sphi 0, %s32
      %p29 = scmp.ge.s32.totalorder %s28, 4
      %s35 = sphi 0, %s47
      %s36 = sphi 0, %s43
      %s37 = sphi 0, %s35
      %s38 = sphi 0, %s36
      %s39 = sphi 0, %s37
      %s40 = sphi 0, %s38
      %s52 = sphi 0, %s54
      %s55 = sphi 0, %s52
      %s56 = sphi 0, %s55
      %s72 = sphi 0, %s56
      %s76 = sphi 0, %s76
      %s78 = sphi 0, %s76
      %s79 = sphi 0, %s78
      %s93 = sphi 0, %s79
      %s97 = sphi 0, %s97
      %s99 = sphi 0, %s97
      %s100 = sphi 0, %s99
      %s114 = sphi 0, %s100
      %s118 = sphi 0, %s118
      %s120 = sphi 0, %s118
      %s121 = sphi 0, %s120
      %s135 = sphi 0, %s121
      %s139 = sphi 0, %s139
      %s141 = sphi 0, %s139
      %s142 = sphi 0, %s141
      %s156 = sphi 0, %s142
      %s160 = sphi 0, %s160
      %s162 = sphi 0, %s160
      %s163 = sphi 0, %s162
      %s177 = sphi 0, %s163
      %s181 = sphi 0, %s181
      %s183 = sphi 0, %s181
      %s184 = sphi 0, %s183
      %s198 = sphi 0, %s184
      %s202 = sphi 0, %s202
      %s204 = sphi 0, %s202
      %s205 = sphi 0, %s204
      %s219 = sphi 0, %s205
      %s223 = sphi 0, %s223
      %s225 = sphi 0, %s223
      %s226 = sphi 0, %s225
      %s240 = sphi 0, %s226
      %s244 = sphi 0, %s244
      %s246 = sphi 0, %s244
      %s247 = sphi 0, %s246
      %s261 = sphi 0, %s247
      %s265 = sphi 0, %s265
      %s267 = sphi 0, %s265
      %s268 = sphi 0, %s267
      %s282 = sphi 0, %s268
      %s290 = sphi 0, %s292
      %s293 = sphi 0, %s290
      %s294 = sphi 0, %s293
      %s310 = sphi 0, %s294
      %s318 = sphi 0, %s320
      %s321 = sphi 0, %s318
      %s322 = sphi 0, %s321
      %s338 = sphi 0, %s322
      %s346 = sphi 0, %s348
      %s349 = sphi 0, %s346
      %s350 = sphi 0, %s349
      %s366 = sphi 0, %s350
    $region4: #{tpu_custom_call.1} parent=1 // loop_header_branch
      %31 = sbr.rel (%p29) target = $region8
    $region5: #{tpu_custom_call.1} parent=1 // loop_body
      %s33 = ssub.s32 %s28, 1
      %s34 = ssub.s32 %s28, 2
      %s41 = sadd.s32 1, %s36
      %p42 = scmp.ge.s32.totalorder %s41, 1
      %s43 = scalar_select %p42, 0, %s41
      %s44 = sadd.s32 1, %s35
      %s45 = scalar_select %p42, %s44, %s35
      %p46 = scmp.ge.s32.totalorder %s45, 2
      %s47 = scalar_select %p46, 0, %s45
      %s48 = ssub.s32 %s35, %s47
      %s49 = ssub.s32 %s36, %s43
      %s50 = sor.u32 %s48, %s49
      %p51 = scmp.eq.s32.totalorder %s50, 0
      %s53 = sadd.s32 %s52, 1
      %s54 = scalar_select %p51, %s52, %s53
      %p57 = pneg %p51
      %p58 = scmp.eq.s32.totalorder %s28, 1
      %p59 = por %p57, %p58
      %p60 = scmp.ne.s32.totalorder %s52, %s55
      %p61 = scmp.eq.s32.totalorder %s28, 0
      %p62 = por %p60, %p61
      %p63 = scmp.ne.s32.totalorder %s52, %s55
      %p64 = scmp.eq.s32.totalorder %s33, 1
      %p65 = por %p63, %p64
      %p66 = scmp.ne.s32.totalorder %s55, %s56
      %p67 = scmp.eq.s32.totalorder %s33, 0
      %p68 = por %p66, %p67
      %p69 = scmp.ne.s32.totalorder %s55, %s56
      %p70 = scmp.eq.s32.totalorder %s34, 1
      %p71 = por %p69, %p70
      %p73 = scmp.ne.s32.totalorder %s56, %s72
      %p74 = scmp.eq.s32.totalorder %s34, 0
      %p75 = por %p73, %p74
      %s77 = sadd.s32 %s76, 1
      %p80 = scmp.eq.s32.totalorder %s28, 1
      %p81 = scmp.ne.s32.totalorder %s76, %s78
      %p82 = scmp.eq.s32.totalorder %s28, 0
      %p83 = por %p81, %p82
      %p84 = scmp.ne.s32.totalorder %s76, %s78
      %p85 = scmp.eq.s32.totalorder %s33, 1
      %p86 = por %p84, %p85
      %p87 = scmp.ne.s32.totalorder %s78, %s79
      %p88 = scmp.eq.s32.totalorder %s33, 0
      %p89 = por %p87, %p88
      %p90 = scmp.ne.s32.totalorder %s78, %s79
      %p91 = scmp.eq.s32.totalorder %s34, 1
      %p92 = por %p90, %p91
      %p94 = scmp.ne.s32.totalorder %s79, %s93
      %p95 = scmp.eq.s32.totalorder %s34, 0
      %p96 = por %p94, %p95
      %s98 = sadd.s32 %s97, 1
      %p101 = scmp.eq.s32.totalorder %s28, 1
      %p102 = scmp.ne.s32.totalorder %s97, %s99
      %p103 = scmp.eq.s32.totalorder %s28, 0
      %p104 = por %p102, %p103
      %p105 = scmp.ne.s32.totalorder %s97, %s99
      %p106 = scmp.eq.s32.totalorder %s33, 1
      %p107 = por %p105, %p106
      %p108 = scmp.ne.s32.totalorder %s99, %s100
      %p109 = scmp.eq.s32.totalorder %s33, 0
      %p110 = por %p108, %p109
      %p111 = scmp.ne.s32.totalorder %s99, %s100
      %p112 = scmp.eq.s32.totalorder %s34, 1
      %p113 = por %p111, %p112
      %p115 = scmp.ne.s32.totalorder %s100, %s114
      %p116 = scmp.eq.s32.totalorder %s34, 0
      %p117 = por %p115, %p116
      %s119 = sadd.s32 %s118, 1
      %p122 = scmp.eq.s32.totalorder %s28, 1
      %p123 = scmp.ne.s32.totalorder %s118, %s120
      %p124 = scmp.eq.s32.totalorder %s28, 0
      %p125 = por %p123, %p124
      %p126 = scmp.ne.s32.totalorder %s118, %s120
      %p127 = scmp.eq.s32.totalorder %s33, 1
      %p128 = por %p126, %p127
      %p129 = scmp.ne.s32.totalorder %s120, %s121
      %p130 = scmp.eq.s32.totalorder %s33, 0
      %p131 = por %p129, %p130
      %p132 = scmp.ne.s32.totalorder %s120, %s121
      %p133 = scmp.eq.s32.totalorder %s34, 1
      %p134 = por %p132, %p133
      %p136 = scmp.ne.s32.totalorder %s121, %s135
      %p137 = scmp.eq.s32.totalorder %s34, 0
      %p138 = por %p136, %p137
      %s140 = sadd.s32 %s139, 1
      %p143 = scmp.eq.s32.totalorder %s28, 1
      %p144 = scmp.ne.s32.totalorder %s139, %s141
      %p145 = scmp.eq.s32.totalorder %s28, 0
      %p146 = por %p144, %p145
      %p147 = scmp.ne.s32.totalorder %s139, %s141
      %p148 = scmp.eq.s32.totalorder %s33, 1
      %p149 = por %p147, %p148
      %p150 = scmp.ne.s32.totalorder %s141, %s142
      %p151 = scmp.eq.s32.totalorder %s33, 0
      %p152 = por %p150, %p151
      %p153 = scmp.ne.s32.totalorder %s141, %s142
      %p154 = scmp.eq.s32.totalorder %s34, 1
      %p155 = por %p153, %p154
      %p157 = scmp.ne.s32.totalorder %s142, %s156
      %p158 = scmp.eq.s32.totalorder %s34, 0
      %p159 = por %p157, %p158
      %s161 = sadd.s32 %s160, 1
      %p164 = scmp.eq.s32.totalorder %s28, 1
      %p165 = scmp.ne.s32.totalorder %s160, %s162
      %p166 = scmp.eq.s32.totalorder %s28, 0
      %p167 = por %p165, %p166
      %p168 = scmp.ne.s32.totalorder %s160, %s162
      %p169 = scmp.eq.s32.totalorder %s33, 1
      %p170 = por %p168, %p169
      %p171 = scmp.ne.s32.totalorder %s162, %s163
      %p172 = scmp.eq.s32.totalorder %s33, 0
      %p173 = por %p171, %p172
      %p174 = scmp.ne.s32.totalorder %s162, %s163
      %p175 = scmp.eq.s32.totalorder %s34, 1
      %p176 = por %p174, %p175
      %p178 = scmp.ne.s32.totalorder %s163, %s177
      %p179 = scmp.eq.s32.totalorder %s34, 0
      %p180 = por %p178, %p179
      %s182 = sadd.s32 %s181, 1
      %p185 = scmp.eq.s32.totalorder %s28, 1
      %p186 = scmp.ne.s32.totalorder %s181, %s183
      %p187 = scmp.eq.s32.totalorder %s28, 0
      %p188 = por %p186, %p187
      %p189 = scmp.ne.s32.totalorder %s181, %s183
      %p190 = scmp.eq.s32.totalorder %s33, 1
      %p191 = por %p189, %p190
      %p192 = scmp.ne.s32.totalorder %s183, %s184
      %p193 = scmp.eq.s32.totalorder %s33, 0
      %p194 = por %p192, %p193
      %p195 = scmp.ne.s32.totalorder %s183, %s184
      %p196 = scmp.eq.s32.totalorder %s34, 1
      %p197 = por %p195, %p196
      %p199 = scmp.ne.s32.totalorder %s184, %s198
      %p200 = scmp.eq.s32.totalorder %s34, 0
      %p201 = por %p199, %p200
      %s203 = sadd.s32 %s202, 1
      %p206 = scmp.eq.s32.totalorder %s28, 1
      %p207 = scmp.ne.s32.totalorder %s202, %s204
      %p208 = scmp.eq.s32.totalorder %s28, 0
      %p209 = por %p207, %p208
      %p210 = scmp.ne.s32.totalorder %s202, %s204
      %p211 = scmp.eq.s32.totalorder %s33, 1
      %p212 = por %p210, %p211
      %p213 = scmp.ne.s32.totalorder %s204, %s205
      %p214 = scmp.eq.s32.totalorder %s33, 0
      %p215 = por %p213, %p214
      %p216 = scmp.ne.s32.totalorder %s204, %s205
      %p217 = scmp.eq.s32.totalorder %s34, 1
      %p218 = por %p216, %p217
      %p220 = scmp.ne.s32.totalorder %s205, %s219
      %p221 = scmp.eq.s32.totalorder %s34, 0
      %p222 = por %p220, %p221
      %s224 = sadd.s32 %s223, 1
      %p227 = scmp.eq.s32.totalorder %s28, 1
      %p228 = scmp.ne.s32.totalorder %s223, %s225
      %p229 = scmp.eq.s32.totalorder %s28, 0
      %p230 = por %p228, %p229
      %p231 = scmp.ne.s32.totalorder %s223, %s225
      %p232 = scmp.eq.s32.totalorder %s33, 1
      %p233 = por %p231, %p232
      %p234 = scmp.ne.s32.totalorder %s225, %s226
      %p235 = scmp.eq.s32.totalorder %s33, 0
      %p236 = por %p234, %p235
      %p237 = scmp.ne.s32.totalorder %s225, %s226
      %p238 = scmp.eq.s32.totalorder %s34, 1
      %p239 = por %p237, %p238
      %p241 = scmp.ne.s32.totalorder %s226, %s240
      %p242 = scmp.eq.s32.totalorder %s34, 0
      %p243 = por %p241, %p242
      %s245 = sadd.s32 %s244, 1
      %p248 = scmp.eq.s32.totalorder %s28, 1
      %p249 = scmp.ne.s32.totalorder %s244, %s246
      %p250 = scmp.eq.s32.totalorder %s28, 0
      %p251 = por %p249, %p250
      %p252 = scmp.ne.s32.totalorder %s244, %s246
      %p253 = scmp.eq.s32.totalorder %s33, 1
      %p254 = por %p252, %p253
      %p255 = scmp.ne.s32.totalorder %s246, %s247
      %p256 = scmp.eq.s32.totalorder %s33, 0
      %p257 = por %p255, %p256
      %p258 = scmp.ne.s32.totalorder %s246, %s247
      %p259 = scmp.eq.s32.totalorder %s34, 1
      %p260 = por %p258, %p259
      %p262 = scmp.ne.s32.totalorder %s247, %s261
      %p263 = scmp.eq.s32.totalorder %s34, 0
      %p264 = por %p262, %p263
      %s266 = sadd.s32 %s265, 1
      %p269 = scmp.eq.s32.totalorder %s28, 1
      %p270 = scmp.ne.s32.totalorder %s265, %s267
      %p271 = scmp.eq.s32.totalorder %s28, 0
      %p272 = por %p270, %p271
      %p273 = scmp.ne.s32.totalorder %s265, %s267
      %p274 = scmp.eq.s32.totalorder %s33, 1
      %p275 = por %p273, %p274
      %p276 = scmp.ne.s32.totalorder %s267, %s268
      %p277 = scmp.eq.s32.totalorder %s33, 0
      %p278 = por %p276, %p277
      %p279 = scmp.ne.s32.totalorder %s267, %s268
      %p280 = scmp.eq.s32.totalorder %s34, 1
      %p281 = por %p279, %p280
      %p283 = scmp.ne.s32.totalorder %s268, %s282
      %p284 = scmp.eq.s32.totalorder %s34, 0
      %p285 = por %p283, %p284
      %s286 = ssub.s32 %s35, %s47
      %s287 = ssub.s32 %s36, %s43
      %s288 = sor.u32 %s286, %s287
      %p289 = scmp.eq.s32.totalorder %s288, 0
      %s291 = sadd.s32 %s290, 1
      %s292 = scalar_select %p289, %s290, %s291
      %p295 = pneg %p289
      %p296 = scmp.eq.s32.totalorder %s28, 1
      %p297 = por %p295, %p296
      %p298 = scmp.ne.s32.totalorder %s290, %s293
      %p299 = scmp.eq.s32.totalorder %s28, 0
      %p300 = por %p298, %p299
      %p301 = scmp.ne.s32.totalorder %s290, %s293
      %p302 = scmp.eq.s32.totalorder %s33, 1
      %p303 = por %p301, %p302
      %p304 = scmp.ne.s32.totalorder %s293, %s294
      %p305 = scmp.eq.s32.totalorder %s33, 0
      %p306 = por %p304, %p305
      %p307 = scmp.ne.s32.totalorder %s293, %s294
      %p308 = scmp.eq.s32.totalorder %s34, 1
      %p309 = por %p307, %p308
      %p311 = scmp.ne.s32.totalorder %s294, %s310
      %p312 = scmp.eq.s32.totalorder %s34, 0
      %p313 = por %p311, %p312
      %s314 = ssub.s32 %s35, %s47
      %s315 = ssub.s32 %s36, %s43
      %s316 = sor.u32 %s314, %s315
      %p317 = scmp.eq.s32.totalorder %s316, 0
      %s319 = sadd.s32 %s318, 1
      %s320 = scalar_select %p317, %s318, %s319
      %p323 = pneg %p317
      %p324 = scmp.eq.s32.totalorder %s28, 1
      %p325 = por %p323, %p324
      %p326 = scmp.ne.s32.totalorder %s318, %s321
      %p327 = scmp.eq.s32.totalorder %s28, 0
      %p328 = por %p326, %p327
      %p329 = scmp.ne.s32.totalorder %s318, %s321
      %p330 = scmp.eq.s32.totalorder %s33, 1
      %p331 = por %p329, %p330
      %p332 = scmp.ne.s32.totalorder %s321, %s322
      %p333 = scmp.eq.s32.totalorder %s33, 0
      %p334 = por %p332, %p333
      %p335 = scmp.ne.s32.totalorder %s321, %s322
      %p336 = scmp.eq.s32.totalorder %s34, 1
      %p337 = por %p335, %p336
      %p339 = scmp.ne.s32.totalorder %s322, %s338
      %p340 = scmp.eq.s32.totalorder %s34, 0
      %p341 = por %p339, %p340
      %s342 = ssub.s32 %s35, %s47
      %s343 = ssub.s32 %s36, %s43
      %s344 = sor.u32 %s342, %s343
      %p345 = scmp.eq.s32.totalorder %s344, 0
      %s347 = sadd.s32 %s346, 1
      %s348 = scalar_select %p345, %s346, %s347
      %p351 = pneg %p345
      %p352 = scmp.eq.s32.totalorder %s28, 1
      %p353 = por %p351, %p352
      %p354 = scmp.ne.s32.totalorder %s346, %s349
      %p355 = scmp.eq.s32.totalorder %s28, 0
      %p356 = por %p354, %p355
      %p357 = scmp.ne.s32.totalorder %s346, %s349
      %p358 = scmp.eq.s32.totalorder %s33, 1
      %p359 = por %p357, %p358
      %p360 = scmp.ne.s32.totalorder %s349, %s350
      %p361 = scmp.eq.s32.totalorder %s33, 0
      %p362 = por %p360, %p361
      %p363 = scmp.ne.s32.totalorder %s349, %s350
      %p364 = scmp.eq.s32.totalorder %s34, 1
      %p365 = por %p363, %p364
      %p367 = scmp.ne.s32.totalorder %s350, %s366
      %p368 = scmp.eq.s32.totalorder %s34, 0
      %p369 = por %p367, %p368
      %p370 = scmp.le.s32.totalorder 1, %s28
      %p371 = scmp.lt.s32.totalorder %s28, 3
      %p372 = pnand %p370, %p371
      %p373 = pneg %p372
      // Predicated region
      $region9: #{tpu_custom_call.1} parent=5 // pred_check
        _
      $region10: #{tpu_custom_call.1} parent=5 // pred_check_branch
        %375 = sbr.rel (%p372) target = $region12
      $region11: #{tpu_custom_call.1} parent=5 // pred_region
        %s376 = ssub.s32 %s28, 1
        // Predicated region
        $region13: #{tpu_custom_call.1} parent=11 // pred_check
          %p377 = pneg %p89
        $region14: #{tpu_custom_call.1} parent=11 // pred_check_branch
          %379 = sbr.rel (%p377) target = $region16
        $region15: #{tpu_custom_call.1} parent=11 // pred_region
          _
        $region16: #{tpu_custom_call.1} parent=11 // pred_fallthru
          _
        // Predicated region
        $region17: #{tpu_custom_call.1} parent=11 // pred_check
          %p380 = pneg %p110
        $region18: #{tpu_custom_call.1} parent=11 // pred_check_branch
          %382 = sbr.rel (%p380) target = $region20
        $region19: #{tpu_custom_call.1} parent=11 // pred_region
          _
        $region20: #{tpu_custom_call.1} parent=11 // pred_fallthru
          _
        // Predicated region
        $region21: #{tpu_custom_call.1} parent=11 // pred_check
          %p383 = pneg %p131
        $region22: #{tpu_custom_call.1} parent=11 // pred_check_branch
          %385 = sbr.rel (%p383) target = $region24
        $region23: #{tpu_custom_call.1} parent=11 // pred_region
          _
        $region24: #{tpu_custom_call.1} parent=11 // pred_fallthru
          _
        // Predicated region
        $region25: #{tpu_custom_call.1} parent=11 // pred_check
          %p386 = pneg %p152
        $region26: #{tpu_custom_call.1} parent=11 // pred_check_branch
          %388 = sbr.rel (%p386) target = $region28
        $region27: #{tpu_custom_call.1} parent=11 // pred_region
          _
        $region28: #{tpu_custom_call.1} parent=11 // pred_fallthru
          _
        // Predicated region
        $region29: #{tpu_custom_call.1} parent=11 // pred_check
          %p389 = pneg %p173
        $region30: #{tpu_custom_call.1} parent=11 // pred_check_branch
          %391 = sbr.rel (%p389) target = $region32
        $region31: #{tpu_custom_call.1} parent=11 // pred_region
          _
        $region32: #{tpu_custom_call.1} parent=11 // pred_fallthru
          _
        // Predicated region
        $region33: #{tpu_custom_call.1} parent=11 // pred_check
          %p392 = pneg %p194
        $region34: #{tpu_custom_call.1} parent=11 // pred_check_branch
          %394 = sbr.rel (%p392) target = $region36
        $region35: #{tpu_custom_call.1} parent=11 // pred_region
          _
        $region36: #{tpu_custom_call.1} parent=11 // pred_fallthru
          _
        // Predicated region
        $region37: #{tpu_custom_call.1} parent=11 // pred_check
          %p395 = pneg %p215
        $region38: #{tpu_custom_call.1} parent=11 // pred_check_branch
          %397 = sbr.rel (%p395) target = $region40
        $region39: #{tpu_custom_call.1} parent=11 // pred_region
          _
        $region40: #{tpu_custom_call.1} parent=11 // pred_fallthru
          _
        // Predicated region
        $region41: #{tpu_custom_call.1} parent=11 // pred_check
          %p398 = pneg %p236
        $region42: #{tpu_custom_call.1} parent=11 // pred_check_branch
          %400 = sbr.rel (%p398) target = $region44
        $region43: #{tpu_custom_call.1} parent=11 // pred_region
          _
        $region44: #{tpu_custom_call.1} parent=11 // pred_fallthru
          _
        // Predicated region
        $region45: #{tpu_custom_call.1} parent=11 // pred_check
          %p401 = pneg %p257
        $region46: #{tpu_custom_call.1} parent=11 // pred_check_branch
          %403 = sbr.rel (%p401) target = $region48
        $region47: #{tpu_custom_call.1} parent=11 // pred_region
          _
        $region48: #{tpu_custom_call.1} parent=11 // pred_fallthru
          _
        // Predicated region
        $region49: #{tpu_custom_call.1} parent=11 // pred_check
          %p404 = pneg %p278
        $region50: #{tpu_custom_call.1} parent=11 // pred_check_branch
          %406 = sbr.rel (%p404) target = $region52
        $region51: #{tpu_custom_call.1} parent=11 // pred_region
          _
        $region52: #{tpu_custom_call.1} parent=11 // pred_fallthru
          _
      $region12: #{tpu_custom_call.1} parent=5 // pred_fallthru
        _
      %p407 = scmp.lt.s32.totalorder %s28, 2
      // Predicated region
      $region53: #{tpu_custom_call.1} parent=5 // pred_check
        %p408 = pneg %p407
      $region54: #{tpu_custom_call.1} parent=5 // pred_check_branch
        %410 = sbr.rel (%p408) target = $region56
      $region55: #{tpu_custom_call.1} parent=5 // pred_region
        // Predicated region
        $region57: #{tpu_custom_call.1} parent=55 // pred_check
          %p411 = pneg %p62
        $region58: #{tpu_custom_call.1} parent=55 // pred_check_branch
          %413 = sbr.rel (%p411) target = $region60
        $region59: #{tpu_custom_call.1} parent=55 // pred_region
          %p414 = scmp.lt.s32.totalorder %s35, 1
          %s415 = scalar_select %p414, %s35, 1
          %p416 = scmp.lt.s32.totalorder %s36, 0
          %s417 = scalar_select %p416, %s36, 0
          %s418 = smul.addr %s415, 64
          %s419 = sadd.s32 %s417, %s418
          %s420 = smul.addr %s419, 4
          %s421 = scalar_lea.vmem %s0, %s420
        $region60: #{tpu_custom_call.1} parent=55 // pred_fallthru
          _
      $region56: #{tpu_custom_call.1} parent=5 // pred_fallthru
        _
      %p422 = scmp.le.s32.totalorder 1, %s28
      %p423 = scmp.lt.s32.totalorder %s28, 3
      %p424 = pnand %p422, %p423
      %p425 = pneg %p424
      // Predicated region
      $region61: #{tpu_custom_call.1} parent=5 // pred_check
        _
      $region62: #{tpu_custom_call.1} parent=5 // pred_check_branch
        %427 = sbr.rel (%p424) target = $region64
      $region63: #{tpu_custom_call.1} parent=5 // pred_region
        %s428 = ssub.s32 %s28, 1
        %p429 = scmp.lt.s32.totalorder %s37, 1
        %s430 = scalar_select %p429, %s37, 1
        %p431 = scmp.lt.s32.totalorder %s38, 0
        %s432 = scalar_select %p431, %s38, 0
        %s433 = smul.addr %s430, 64
        %s434 = sadd.s32 %s432, %s433
        %s435 = smul.addr %s434, 4
        %s436 = scalar_lea.vmem %s0, %s435
        %p437 = pneg %p68
        %p438 = pneg %p65
        %p439 = pneg %p89
        %p440 = pneg %p86
        %p441 = pneg %p110
        %p442 = pneg %p107
        %p443 = pneg %p131
        %p444 = pneg %p128
        %p445 = pneg %p152
        %p446 = pneg %p149
        %p447 = pneg %p173
        %p448 = pneg %p170
        %p449 = pneg %p194
        %p450 = pneg %p191
        %p451 = pneg %p215
        %p452 = pneg %p212
        %p453 = pneg %p236
        %p454 = pneg %p233
        %p455 = pneg %p257
        %p456 = pneg %p254
        %p457 = pneg %p278
        %p458 = pneg %p275
        %p459 = pneg %p306
        %p460 = pneg %p303
        %p461 = scmp.lt.s32.totalorder %s37, 1
        %s462 = scalar_select %p461, %s37, 1
        %p463 = scmp.lt.s32.totalorder %s38, 0
        %s464 = scalar_select %p463, %s38, 0
        %s465 = smul.addr %s462, 4
        %s466 = sadd.s32 %s464, %s465
        %s467 = smul.addr %s466, 8
        %s468 = scalar_lea.vmem %s11, %s467
        %p469 = pneg %p334
        %p470 = pneg %p331
        %s471 = sand.u32 %s321, 1
        %s472 = scalar_lea.sflag [#allocation4], %s471
        %s473 = sand.u32 %s321, 1
        %s474 = smul.addr %s473, 16
        %s475 = scalar_lea.vmem [#allocation3], %s474
        %p476 = pneg %p362
        %p477 = pneg %p359
        %s478 = sand.u32 %s349, 1
        %s479 = scalar_lea.sflag [#allocation6], %s478
        %s480 = sand.u32 %s349, 1
        %s481 = scalar_lea.vmem [#allocation5], %s480
        %p482 = scmp.lt.s32.totalorder %s37, 1
        %s483 = scalar_select %p482, %s37, 1
        %p484 = scmp.lt.s32.totalorder %s38, 0
        %s485 = scalar_select %p484, %s38, 0
        %s486 = smul.addr %s483, 64
        %s487 = sadd.s32 %s485, %s486
        %s488 = smul.addr %s487, 4
        %s489 = scalar_lea.vmem %s0, %s488
        %p490 = scmp.lt.s32.totalorder %s37, 1
        %s491 = scalar_select %p490, %s37, 1
        %p492 = scmp.lt.s32.totalorder %s38, 0
        %s493 = scalar_select %p492, %s38, 0
        %s494 = smul.addr %s491, 4
        %s495 = sadd.s32 %s493, %s494
        %s496 = smul.addr %s495, 8
        %s497 = scalar_lea.vmem %s11, %s496
        %v499 = vld [vmem:[%s489] sm:$0xf]
        %v500 = vld [vmem:[%s489 + $0x4] sm:$0xf]
        %v501 = vld [vmem:[%s489 + $0x8] sm:$0xf]
        %v502 = vld [vmem:[%s489 + $0xc] sm:$0xf]
        %v503 = vld [vmem:[%s489 + $0x10] sm:$0xf]
        %v504 = vld [vmem:[%s489 + $0x14] sm:$0xf]
        %v505 = vld [vmem:[%s489 + $0x18] sm:$0xf]
        %v506 = vld [vmem:[%s489 + $0x1c] sm:$0xf]
        %v507 = vld [vmem:[%s489 + $0x20] sm:$0xf]
        %v508 = vld [vmem:[%s489 + $0x24] sm:$0xf]
        %v509 = vld [vmem:[%s489 + $0x28] sm:$0xf]
        %v510 = vld [vmem:[%s489 + $0x2c] sm:$0xf]
        %v511 = vld [vmem:[%s489 + $0x30] sm:$0xf]
        %v512 = vld [vmem:[%s489 + $0x34] sm:$0xf]
        %v513 = vld [vmem:[%s489 + $0x38] sm:$0xf]
        %v514 = vld [vmem:[%s489 + $0x3c] sm:$0xf]
        %v515 = vld [vmem:[%s489 + $0x40] sm:$0xf]
        %v516 = vld [vmem:[%s489 + $0x44] sm:$0xf]
        %v517 = vld [vmem:[%s489 + $0x48] sm:$0xf]
        %v518 = vld [vmem:[%s489 + $0x4c] sm:$0xf]
        %v519 = vld [vmem:[%s489 + $0x50] sm:$0xf]
        %v520 = vld [vmem:[%s489 + $0x54] sm:$0xf]
        %v521 = vld [vmem:[%s489 + $0x58] sm:$0xf]
        %v522 = vld [vmem:[%s489 + $0x5c] sm:$0xf]
        %v523 = vld [vmem:[%s489 + $0x60] sm:$0xf]
        %v524 = vld [vmem:[%s489 + $0x64] sm:$0xf]
        %v525 = vld [vmem:[%s489 + $0x68] sm:$0xf]
        %v526 = vld [vmem:[%s489 + $0x6c] sm:$0xf]
        %v527 = vld [vmem:[%s489 + $0x70] sm:$0xf]
        %v528 = vld [vmem:[%s489 + $0x74] sm:$0xf]
        %v529 = vld [vmem:[%s489 + $0x78] sm:$0xf]
        %v530 = vld [vmem:[%s489 + $0x7c] sm:$0xf]
        %v531 = vld [vmem:[%s489 + $0x80] sm:$0xf]
        %v532 = vld [vmem:[%s489 + $0x84] sm:$0xf]
        %v533 = vld [vmem:[%s489 + $0x88] sm:$0xf]
        %v534 = vld [vmem:[%s489 + $0x8c] sm:$0xf]
        %v535 = vld [vmem:[%s489 + $0x90] sm:$0xf]
        %v536 = vld [vmem:[%s489 + $0x94] sm:$0xf]
        %v537 = vld [vmem:[%s489 + $0x98] sm:$0xf]
        %v538 = vld [vmem:[%s489 + $0x9c] sm:$0xf]
        %v539 = vld [vmem:[%s489 + $0xa0] sm:$0xf]
        %v540 = vld [vmem:[%s489 + $0xa4] sm:$0xf]
        %v541 = vld [vmem:[%s489 + $0xa8] sm:$0xf]
        %v542 = vld [vmem:[%s489 + $0xac] sm:$0xf]
        %v543 = vld [vmem:[%s489 + $0xb0] sm:$0xf]
        %v544 = vld [vmem:[%s489 + $0xb4] sm:$0xf]
        %v545 = vld [vmem:[%s489 + $0xb8] sm:$0xf]
        %v546 = vld [vmem:[%s489 + $0xbc] sm:$0xf]
        %v547 = vld [vmem:[%s489 + $0xc0] sm:$0xf]
        %v548 = vld [vmem:[%s489 + $0xc4] sm:$0xf]
        %v549 = vld [vmem:[%s489 + $0xc8] sm:$0xf]
        %v550 = vld [vmem:[%s489 + $0xcc] sm:$0xf]
        %v551 = vld [vmem:[%s489 + $0xd0] sm:$0xf]
        %v552 = vld [vmem:[%s489 + $0xd4] sm:$0xf]
        %v553 = vld [vmem:[%s489 + $0xd8] sm:$0xf]
        %v554 = vld [vmem:[%s489 + $0xdc] sm:$0xf]
        %v555 = vld [vmem:[%s489 + $0xe0] sm:$0xf]
        %v556 = vld [vmem:[%s489 + $0xe4] sm:$0xf]
        %v557 = vld [vmem:[%s489 + $0xe8] sm:$0xf]
        %v558 = vld [vmem:[%s489 + $0xec] sm:$0xf]
        %v559 = vld [vmem:[%s489 + $0xf0] sm:$0xf]
        %v560 = vld [vmem:[%s489 + $0xf4] sm:$0xf]
        %v561 = vld [vmem:[%s489 + $0xf8] sm:$0xf]
        %v562 = vld [vmem:[%s489 + $0xfc] sm:$0xf]
        %v563 = vld [vmem:[%s1] sm:$0xff]
        %v564 = vld [vmem:[%s1 + $0x8] sm:$0xff]
        %v565 = vld [vmem:[%s1 + $0x10] sm:$0xff]
        %v566 = vld [vmem:[%s1 + $0x18] sm:$0xff]
        %v567 = vld [vmem:[%s1 + $0x20] sm:$0xff]
        %v568 = vld [vmem:[%s1 + $0x28] sm:$0xff]
        %v569 = vld [vmem:[%s1 + $0x30] sm:$0xff]
        %v570 = vld [vmem:[%s1 + $0x38] sm:$0xff]
        %v571 = vld [vmem:[%s2] sm:$0xff]
        %v572 = vld [vmem:[%s2 + $0x8] sm:$0xff]
        %v573 = vld [vmem:[%s2 + $0x10] sm:$0xff]
        %v574 = vld [vmem:[%s2 + $0x18] sm:$0xff]
        %576 = vset.pattern.permute.xlu0 0
        %577 = vperm.xlu0 %576, %v571
        %v578 = vpop.permute.xlu0 %577
        %581 = vset.pattern.permute.xlu0 0
        %582 = vperm.xlu0 %581, %v572
        %v583 = vpop.permute.xlu0 %582
        %586 = vset.pattern.permute.xlu0 0
        %587 = vperm.xlu0 %586, %v573
        %v588 = vpop.permute.xlu0 %587
        %591 = vset.pattern.permute.xlu0 0
        %592 = vperm.xlu0 %591, %v574
        %v593 = vpop.permute.xlu0 %592
        %v603 = vunpack.c.l.b16 %v563
        %v604 = vunpack.c.h.b16 %v563
        %v605 = vunpack.c.l.b16 %v564
        %v606 = vunpack.c.h.b16 %v564
        %v607 = vunpack.c.l.b16 %v565
        %v608 = vunpack.c.h.b16 %v565
        %v609 = vunpack.c.l.b16 %v566
        %v610 = vunpack.c.h.b16 %v566
        %v611 = vunpack.c.l.b16 %v567
        %v612 = vunpack.c.h.b16 %v567
        %v613 = vunpack.c.l.b16 %v568
        %v614 = vunpack.c.h.b16 %v568
        %v615 = vunpack.c.l.b16 %v569
        %v616 = vunpack.c.h.b16 %v569
        %v617 = vunpack.c.l.b16 %v570
        %v618 = vunpack.c.h.b16 %v570
        %v619 = vpack.c.b16 %v607, %v603
        %v620 = vpack.c.b16 %v608, %v604
        %v621 = vpack.c.b16 %v609, %v605
        %v622 = vpack.c.b16 %v610, %v606
        %v623 = vpack.c.b16 %v615, %v611
        %v624 = vpack.c.b16 %v616, %v612
        %v625 = vpack.c.b16 %v617, %v613
        %v626 = vpack.c.b16 %v618, %v614
        %v699 = vunpack.c.l.b16 %v499
        %v700 = vunpack.c.l.b16 %v500
        %v701 = vunpack.c.l.b16 %v501
        %v702 = vunpack.c.l.b16 %v502
        %v703 = vunpack.c.l.b16 %v503
        %v704 = vunpack.c.l.b16 %v504
        %v705 = vunpack.c.l.b16 %v505
        %v706 = vunpack.c.l.b16 %v506
        %v707 = vunpack.c.l.b16 %v507
        %v708 = vunpack.c.l.b16 %v508
        %v709 = vunpack.c.l.b16 %v509
        %v710 = vunpack.c.l.b16 %v510
        %v711 = vunpack.c.l.b16 %v511
        %v712 = vunpack.c.l.b16 %v512
        %v713 = vunpack.c.l.b16 %v513
        %v714 = vunpack.c.l.b16 %v514
        %v715 = vunpack.c.l.b16 %v515
        %v716 = vunpack.c.l.b16 %v516
        %v717 = vunpack.c.l.b16 %v517
        %v718 = vunpack.c.l.b16 %v518
        %v719 = vunpack.c.l.b16 %v519
        %v720 = vunpack.c.l.b16 %v520
        %v721 = vunpack.c.l.b16 %v521
        %v722 = vunpack.c.l.b16 %v522
        %v723 = vunpack.c.l.b16 %v523
        %v724 = vunpack.c.l.b16 %v524
        %v725 = vunpack.c.l.b16 %v525
        %v726 = vunpack.c.l.b16 %v526
        %v727 = vunpack.c.l.b16 %v527
        %v728 = vunpack.c.l.b16 %v528
        %v729 = vunpack.c.l.b16 %v529
        %v730 = vunpack.c.l.b16 %v530
        %v731 = vunpack.c.l.b16 %v531
        %v732 = vunpack.c.l.b16 %v532
        %v733 = vunpack.c.l.b16 %v533
        %v734 = vunpack.c.l.b16 %v534
        %v735 = vunpack.c.l.b16 %v535
        %v736 = vunpack.c.l.b16 %v536
        %v737 = vunpack.c.l.b16 %v537
        %v738 = vunpack.c.l.b16 %v538
        %v739 = vunpack.c.l.b16 %v539
        %v740 = vunpack.c.l.b16 %v540
        %v741 = vunpack.c.l.b16 %v541
        %v742 = vunpack.c.l.b16 %v542
        %v743 = vunpack.c.l.b16 %v543
        %v744 = vunpack.c.l.b16 %v544
        %v745 = vunpack.c.l.b16 %v545
        %v746 = vunpack.c.l.b16 %v546
        %v747 = vunpack.c.l.b16 %v547
        %v748 = vunpack.c.l.b16 %v548
        %v749 = vunpack.c.l.b16 %v549
        %v750 = vunpack.c.l.b16 %v550
        %v751 = vunpack.c.l.b16 %v551
        %v752 = vunpack.c.l.b16 %v552
        %v753 = vunpack.c.l.b16 %v553
        %v754 = vunpack.c.l.b16 %v554
        %v755 = vunpack.c.l.b16 %v555
        %v756 = vunpack.c.l.b16 %v556
        %v757 = vunpack.c.l.b16 %v557
        %v758 = vunpack.c.l.b16 %v558
        %v759 = vunpack.c.l.b16 %v559
        %v760 = vunpack.c.l.b16 %v560
        %v761 = vunpack.c.l.b16 %v561
        %v762 = vunpack.c.l.b16 %v562
        %v763 = vpack.c.b16 %v700, %v699
        %v764 = vpack.c.b16 %v702, %v701
        %v765 = vpack.c.b16 %v704, %v703
        %v766 = vpack.c.b16 %v706, %v705
        %v767 = vpack.c.b16 %v708, %v707
        %v768 = vpack.c.b16 %v710, %v709
        %v769 = vpack.c.b16 %v712, %v711
        %v770 = vpack.c.b16 %v714, %v713
        %v771 = vpack.c.b16 %v716, %v715
        %v772 = vpack.c.b16 %v718, %v717
        %v773 = vpack.c.b16 %v720, %v719
        %v774 = vpack.c.b16 %v722, %v721
        %v775 = vpack.c.b16 %v724, %v723
        %v776 = vpack.c.b16 %v726, %v725
        %v777 = vpack.c.b16 %v728, %v727
        %v778 = vpack.c.b16 %v730, %v729
        %v779 = vpack.c.b16 %v732, %v731
        %v780 = vpack.c.b16 %v734, %v733
        %v781 = vpack.c.b16 %v736, %v735
        %v782 = vpack.c.b16 %v738, %v737
        %v783 = vpack.c.b16 %v740, %v739
        %v784 = vpack.c.b16 %v742, %v741
        %v785 = vpack.c.b16 %v744, %v743
        %v786 = vpack.c.b16 %v746, %v745
        %v787 = vpack.c.b16 %v748, %v747
        %v788 = vpack.c.b16 %v750, %v749
        %v789 = vpack.c.b16 %v752, %v751
        %v790 = vpack.c.b16 %v754, %v753
        %v791 = vpack.c.b16 %v756, %v755
        %v792 = vpack.c.b16 %v758, %v757
        %v793 = vpack.c.b16 %v760, %v759
        %v794 = vpack.c.b16 %v762, %v761
        %827 = vmatprep.subr.bf16.mxu0 0
        %828 = vmatpush1.bf16.msra.mxu0 %v770
        %829 = vmatprep.subr.bf16.mxu0 0
        %830 = vmatpush1.bf16.msra.mxu0 %v769
        %831 = vmatprep.subr.bf16.mxu0 0
        %832 = vmatpush1.bf16.msra.mxu0 %v768
        %833 = vmatprep.subr.bf16.mxu0 0
        %834 = vmatpush1.bf16.msra.mxu0 %v767
        %835 = vmatprep.subr.bf16.mxu0 0
        %836 = vmatpush1.bf16.msra.mxu0 %v766
        %837 = vmatprep.subr.bf16.mxu0 0
        %838 = vmatpush1.bf16.msra.mxu0 %v765
        %839 = vmatprep.subr.bf16.mxu0 0
        %840 = vmatpush1.bf16.msra.mxu0 %v764
        %841 = vmatprep.subr.bf16.mxu0 0
        %842 = vmatpush1.bf16.msra.mxu0 %v763
        %843 = vmatprep.subr.bf16.mxu0 0
        %844 = vmatpush2.bf16.msra.mxu0 %v778
        %845 = vmatprep.subr.bf16.mxu0 0
        %846 = vmatpush2.bf16.msra.mxu0 %v777
        %847 = vmatprep.subr.bf16.mxu0 0
        %848 = vmatpush2.bf16.msra.mxu0 %v776
        %849 = vmatprep.subr.bf16.mxu0 0
        %850 = vmatpush2.bf16.msra.mxu0 %v775
        %851 = vmatprep.subr.bf16.mxu0 0
        %852 = vmatpush2.bf16.msra.mxu0 %v774
        %853 = vmatprep.subr.bf16.mxu0 0
        %854 = vmatpush2.bf16.msra.mxu0 %v773
        %855 = vmatprep.subr.bf16.mxu0 0
        %856 = vmatpush2.bf16.msra.mxu0 %v772
        %857 = vmatprep.subr.bf16.mxu0 0
        %858 = vmatpush2.bf16.msra.mxu0 %v771
        %859 = vmatprep.mubr.bf16.mxu0 %v620
        %860 = vmatmul.mubr.bf16.gmra.mxu0 %v619
        %v861 = vpop.f32.mrf.mxu0
        %v862 = vadd.f32 %v578, %v861
        %v863 = vpop.f32.mrf.mxu0
        %v864 = vpop.f32.mrf.mxu0
        %v865 = vadd.f32 %v583, %v864
        %v866 = vpop.f32.mrf.mxu0
        %867 = vmatprep.mubr.bf16.mxu0 %v624
        %868 = vmatmul.mubr.bf16.gmra.mxu0 %v623
        %v869 = vpop.f32.mrf.mxu0
        %v870 = vadd.f32 %v588, %v869
        %v871 = vpop.f32.mrf.mxu0
        %v872 = vpop.f32.mrf.mxu0
        %v873 = vadd.f32 %v593, %v872
        %v874 = vpop.f32.mrf.mxu0
        %875 = vdwg.mxu0
        %876 = vmatprep.subr.bf16.mxu0 0
        %877 = vmatpush1.bf16.msra.mxu0 %v786
        %878 = vmatprep.subr.bf16.mxu0 0
        %879 = vmatpush1.bf16.msra.mxu0 %v785
        %880 = vmatprep.subr.bf16.mxu0 0
        %881 = vmatpush1.bf16.msra.mxu0 %v784
        %882 = vmatprep.subr.bf16.mxu0 0
        %883 = vmatpush1.bf16.msra.mxu0 %v783
        %884 = vmatprep.subr.bf16.mxu0 0
        %885 = vmatpush1.bf16.msra.mxu0 %v782
        %886 = vmatprep.subr.bf16.mxu0 0
        %887 = vmatpush1.bf16.msra.mxu0 %v781
        %888 = vmatprep.subr.bf16.mxu0 0
        %889 = vmatpush1.bf16.msra.mxu0 %v780
        %890 = vmatprep.subr.bf16.mxu0 0
        %891 = vmatpush1.bf16.msra.mxu0 %v779
        %892 = vmatprep.subr.bf16.mxu0 0
        %893 = vmatpush2.bf16.msra.mxu0 %v794
        %894 = vmatprep.subr.bf16.mxu0 0
        %895 = vmatpush2.bf16.msra.mxu0 %v793
        %896 = vmatprep.subr.bf16.mxu0 0
        %897 = vmatpush2.bf16.msra.mxu0 %v792
        %898 = vmatprep.subr.bf16.mxu0 0
        %899 = vmatpush2.bf16.msra.mxu0 %v791
        %900 = vmatprep.subr.bf16.mxu0 0
        %901 = vmatpush2.bf16.msra.mxu0 %v790
        %902 = vmatprep.subr.bf16.mxu0 0
        %903 = vmatpush2.bf16.msra.mxu0 %v789
        %904 = vmatprep.subr.bf16.mxu0 0
        %905 = vmatpush2.bf16.msra.mxu0 %v788
        %906 = vmatprep.subr.bf16.mxu0 0
        %907 = vmatpush2.bf16.msra.mxu0 %v787
        %908 = vmatprep.mubr.bf16.mxu0 %v622
        %909 = vmatmul.mubr.bf16.gmra.mxu0 %v621
        %v910 = vpop.f32.mrf.mxu0
        %v911 = vadd.f32 %v862, %v910
        %v912 = vpop.f32.mrf.mxu0
        %v913 = vpop.f32.mrf.mxu0
        %v914 = vadd.f32 %v865, %v913
        %v915 = vpop.f32.mrf.mxu0
        %916 = vmatprep.mubr.bf16.mxu0 %v626
        %917 = vmatmul.mubr.bf16.gmra.mxu0 %v625
        %v918 = vpop.f32.mrf.mxu0
        %v919 = vadd.f32 %v870, %v918
        %v920 = vpop.f32.mrf.mxu0
        %v921 = vpop.f32.mrf.mxu0
        %v922 = vadd.f32 %v873, %v921
        %v923 = vpop.f32.mrf.mxu0
        %924 = vdwg.mxu0
        %vm925 = vcmask 130048
        %926 = vst.msk [vmem:[%s497] sm:$0xff] %vm925, %v911
        %927 = vst.msk [vmem:[%s497 + $0x8] sm:$0xff] %vm925, %v914
        %928 = vst.msk [vmem:[%s497 + $0x10] sm:$0xff] %vm925, %v919
        %929 = vst.msk [vmem:[%s497 + $0x18] sm:$0xff] %vm925, %v922
        %v930 = vld [vmem:[%s3] sm:$0xff]
        %v931 = vld [vmem:[%s3 + $0x8] sm:$0xff]
        %v932 = vld [vmem:[%s3 + $0x10] sm:$0xff]
        %v933 = vld [vmem:[%s3 + $0x18] sm:$0xff]
        %935 = vset.pattern.permute.xlu0 0
        %936 = vperm.xlu0 %935, %v930
        %v937 = vpop.permute.xlu0 %936
        %940 = vset.pattern.permute.xlu0 0
        %941 = vperm.xlu0 %940, %v931
        %v942 = vpop.permute.xlu0 %941
        %945 = vset.pattern.permute.xlu0 0
        %946 = vperm.xlu0 %945, %v932
        %v947 = vpop.permute.xlu0 %946
        %950 = vset.pattern.permute.xlu0 0
        %951 = vperm.xlu0 %950, %v933
        %v952 = vpop.permute.xlu0 %951
        %v954 = vmul.f32 %v911, %v937
        %v955 = vmul.f32 %v914, %v942
        %v956 = vmul.f32 %v919, %v947
        %v957 = vmul.f32 %v922, %v952
        %v958 = vld [vmem:[%s4] sm:$0xff]
        %v959 = vld [vmem:[%s4 + $0x8] sm:$0xff]
        %v960 = vld [vmem:[%s4 + $0x10] sm:$0xff]
        %v961 = vld [vmem:[%s4 + $0x18] sm:$0xff]
        %963 = vset.pattern.permute.xlu0 0
        %964 = vperm.xlu0 %963, %v958
        %v965 = vpop.permute.xlu0 %964
        %968 = vset.pattern.permute.xlu0 0
        %969 = vperm.xlu0 %968, %v959
        %v970 = vpop.permute.xlu0 %969
        %973 = vset.pattern.permute.xlu0 0
        %974 = vperm.xlu0 %973, %v960
        %v975 = vpop.permute.xlu0 %974
        %978 = vset.pattern.permute.xlu0 0
        %979 = vperm.xlu0 %978, %v961
        %v980 = vpop.permute.xlu0 %979
        %v982 = vadd.f32 %v954, %v965
        %v983 = vadd.f32 %v955, %v970
        %v984 = vadd.f32 %v956, %v975
        %v985 = vadd.f32 %v957, %v980
        %v986 = vmax.f32 %v982, 0.0
        %v987 = vmax.f32 %v983, 0.0
        %v988 = vmax.f32 %v984, 0.0
        %v989 = vmax.f32 %v985, 0.0
        %v990 = vld [vmem:[%s5] sm:$0xf]
        %v991 = vld [vmem:[%s5 + $0x4] sm:$0xf]
        %v992 = vpack.c.bf16 %v987, %v986
        %v993 = vpack.c.bf16 %v989, %v988
        %v994 = vld [vmem:[%s6] sm:$0xff]
        %v995 = vld [vmem:[%s6 + $0x8] sm:$0xff]
        %997 = vset.pattern.permute.xlu0 0
        %998 = vperm.xlu0 %997, %v994
        %v999 = vpop.permute.xlu0 %998
        %1002 = vset.pattern.permute.xlu0 0
        %1003 = vperm.xlu0 %1002, %v995
        %v1004 = vpop.permute.xlu0 %1003
        %v1008 = vunpack.c.l.b16 %v990
        %v1009 = vunpack.c.l.b16 %v991
        %v1010 = vpack.c.b16 %v1009, %v1008
        %vm1011 = vcmask 261120
        %v1013 = vsel %vm1011, %v1010, 0
        %1015 = vmatprep.subr.bf16.mxu0 0
        %1016 = vmatpush1.bf16.msra.mxu0 0
        %1017 = vmatprep.subr.bf16.mxu0 0
        %1018 = vmatpush1.bf16.msra.mxu0 0
        %1019 = vmatprep.subr.bf16.mxu0 0
        %1020 = vmatpush1.bf16.msra.mxu0 0
        %1021 = vmatprep.subr.bf16.mxu0 0
        %1022 = vmatpush1.bf16.msra.mxu0 0
        %1023 = vmatprep.subr.bf16.mxu0 0
        %1024 = vmatpush1.bf16.msra.mxu0 0
        %1025 = vmatprep.subr.bf16.mxu0 0
        %1026 = vmatpush1.bf16.msra.mxu0 0
        %1027 = vmatprep.subr.bf16.mxu0 0
        %1028 = vmatpush1.bf16.msra.mxu0 %v993
        %1029 = vmatprep.subr.bf16.mxu0 0
        %1030 = vmatpush1.bf16.msra.mxu0 %v992
        %1031 = vmatprep.subr.bf16.mxu0 0
        %1032 = vmatpush2.bf16.msra.mxu0 0
        %1033 = vmatprep.subr.bf16.mxu0 0
        %1034 = vmatpush2.bf16.msra.mxu0 0
        %1035 = vmatprep.subr.bf16.mxu0 0
        %1036 = vmatpush2.bf16.msra.mxu0 0
        %1037 = vmatprep.subr.bf16.mxu0 0
        %1038 = vmatpush2.bf16.msra.mxu0 0
        %1039 = vmatprep.subr.bf16.mxu0 0
        %1040 = vmatpush2.bf16.msra.mxu0 0
        %1041 = vmatprep.subr.bf16.mxu0 0
        %1042 = vmatpush2.bf16.msra.mxu0 0
        %1043 = vmatprep.subr.bf16.mxu0 0
        %1044 = vmatpush2.bf16.msra.mxu0 0
        %1045 = vmatprep.subr.bf16.mxu0 0
        %1046 = vmatpush2.bf16.msra.mxu0 0
        %1047 = vmatprep.mubr.bf16.mxu0 0
        %1048 = vmatmul.mubr.bf16.gmra.mxu0 %v1013
        %v1049 = vpop.f32.mrf.mxu0
        %v1050 = vadd.f32 %v999, %v1049
        %v1051 = vpop.f32.mrf.mxu0
        %v1052 = vpop.f32.mrf.mxu0
        %v1053 = vadd.f32 %v1004, %v1052
        %v1054 = vpop.f32.mrf.mxu0
        %1055 = vdwg.mxu0
        %1056 = vst.msk [vmem:[%s475] sm:$0xff] %vm925, %v1050
        %1057 = vst.msk [vmem:[%s475 + $0x8] sm:$0xff] %vm925, %v1053
        %v1058 = vld [vmem:[%s7] sm:$0xff]
        %v1059 = vld [vmem:[%s7 + $0x8] sm:$0xff]
        %1061 = vset.pattern.permute.xlu0 0
        %1062 = vperm.xlu0 %1061, %v1058
        %v1063 = vpop.permute.xlu0 %1062
        %1066 = vset.pattern.permute.xlu0 0
        %1067 = vperm.xlu0 %1066, %v1059
        %v1068 = vpop.permute.xlu0 %1067
        %v1070 = vmul.f32 %v1050, %v1063
        %v1071 = vmul.f32 %v1053, %v1068
        %v1072 = vld [vmem:[%s8] sm:$0xff]
        %v1073 = vld [vmem:[%s8 + $0x8] sm:$0xff]
        %1075 = vset.pattern.permute.xlu0 0
        %1076 = vperm.xlu0 %1075, %v1072
        %v1077 = vpop.permute.xlu0 %1076
        %1080 = vset.pattern.permute.xlu0 0
        %1081 = vperm.xlu0 %1080, %v1073
        %v1082 = vpop.permute.xlu0 %1081
        %v1084 = vadd.f32 %v1070, %v1077
        %v1085 = vadd.f32 %v1071, %v1082
        %v1086 = vmax.f32 %v1084, 0.0
        %v1087 = vmax.f32 %v1085, 0.0
        %v1088 = vld [vmem:[%s9] sm:$0xff]
        %v1089 = vld [vmem:[%s9 + $0x8] sm:$0xff]
        %1091 = vset.pattern.permute.xlu0 0
        %1092 = vperm.xlu0 %1091, %v1088
        %v1093 = vpop.permute.xlu0 %1092
        %1096 = vset.pattern.permute.xlu0 0
        %1097 = vperm.xlu0 %1096, %v1089
        %v1098 = vpop.permute.xlu0 %1097
        %v1100 = vmul.f32 %v1086, %v1093
        %v1101 = vmul.f32 %v1087, %v1098
        %v1102 = vsel %vm925, %v1100, 0.0
        %v1103 = vsel %vm925, %v1101, 0.0
        %v1104 = vadd.f32 %v1102, %v1103
        %v1105 = vrot.slane %v1104, 4
        %v1106 = vadd.f32 %v1104, %v1105
        %v1107 = vrot.slane %v1106, 2
        %v1108 = vadd.f32 %v1106, %v1107
        %v1109 = vrot.slane %v1108, 1
        %v1110 = vadd.f32 %v1108, %v1109
        %v1111 = vld [vmem:[#allocation2] sm:$0x1]
        %1113 = vset.pattern.permute.xlu0 0
        %1114 = vperm.xlu0 %1113, %v1111
        %v1115 = vpop.permute.xlu0 %1114
        %v1117 = vlaneseq
        %v1118 = vshrl.u32 %v1117, 7
        %v1119 = vsub.s32 0, %v1118
        %v1120 = vrot.slane %v1115, %v1119
        %v1121 = vadd.f32 %v1110, %v1120
        %v1122 = vxor.u32 %v1121, 2147483648
        %v1123 = vmul.f32 %v1122, 1.442695
        %v1124 = vpow.pop %v1123
        %v1125 = vadd.f32 %v1124, 1.0
        %v1126 = vrcp.pop %v1125
        %v1127 = vmul.f32 1.0, %v1126
        %vm1128 = vcmask 122880
        %1129 = vst.msk [vmem:[%s481] sm:$0x1] %vm1128, %v1127
        %p1130 = scmp.lt.s32.totalorder %s37, 1
        %s1131 = scalar_select %p1130, %s37, 1
        %p1132 = scmp.lt.s32.totalorder %s38, 0
        %s1133 = scalar_select %p1132, %s38, 0
        %s1134 = smul.addr %s1131, 4
        %s1135 = sadd.s32 %s1133, %s1134
        %s1136 = smul.addr %s1135, 8
        %s1137 = scalar_lea.vmem %s11, %s1136
        %s1138 = sand.u32 %s321, 1
        %s1139 = scalar_lea.sflag [#allocation4], %s1138
        %s1140 = sand.u32 %s321, 1
        %s1141 = smul.addr %s1140, 16
        %s1142 = scalar_lea.vmem [#allocation3], %s1141
        %s1143 = sand.u32 %s349, 1
        %s1144 = scalar_lea.sflag [#allocation6], %s1143
        %s1145 = sand.u32 %s349, 1
        %s1146 = scalar_lea.vmem [#allocation5], %s1145
        // Predicated region
        $region65: #{tpu_custom_call.1} parent=63 // pred_check
          %p1147 = pneg %p303
        $region66: #{tpu_custom_call.1} parent=63 // pred_check_branch
          %1149 = sbr.rel (%p1147) target = $region68
        $region67: #{tpu_custom_call.1} parent=63 // pred_region
          _
        $region68: #{tpu_custom_call.1} parent=63 // pred_fallthru
          _
        // Predicated region
        $region69: #{tpu_custom_call.1} parent=63 // pred_check
          %p1150 = pneg %p331
        $region70: #{tpu_custom_call.1} parent=63 // pred_check_branch
          %1152 = sbr.rel (%p1150) target = $region72
        $region71: #{tpu_custom_call.1} parent=63 // pred_region
          %s1154 = ssub.s32 256, 256
          %1155 = vsyncadd %s1139, %s1154
          %s1156 = smul.addr %s37, 2
          %s1157 = sadd.s32 %s38, %s1156
          %s1158 = smul.addr %s1157, 128
          %s1159 = scalar_lea.hbm %s12, %s1158
          %s1160 = sshll.u32 %s1142, 4
          %s1161 = int_to_ptr.vmem [resolvable:$true] %s1160
          %1166 = dma.vmem_to_hbm [thread:$0]  %s1161, 256, %s1159, %s1139, 128, 128, 8
        $region72: #{tpu_custom_call.1} parent=63 // pred_fallthru
          _
        // Predicated region
        $region73: #{tpu_custom_call.1} parent=63 // pred_check
          %p1167 = pneg %p359
        $region74: #{tpu_custom_call.1} parent=63 // pred_check_branch
          %1169 = sbr.rel (%p1167) target = $region76
        $region75: #{tpu_custom_call.1} parent=63 // pred_region
          %s1171 = ssub.s32 16, 16
          %1172 = vsyncadd %s1144, %s1171
          %s1173 = sadd.s32 %s38, %s37
          %s1174 = smul.addr %s1173, 16
          %s1175 = scalar_lea.hbm %s13, %s1174
          %s1177 = sshll.u32 %s1146, 4
          %s1178 = int_to_ptr.vmem [resolvable:$true] %s1177
          %1180 = dma.vmem_to_hbm [thread:$0]  %s1178, 16, %s1175, %s1144
        $region76: #{tpu_custom_call.1} parent=63 // pred_fallthru
          _
      $region64: #{tpu_custom_call.1} parent=5 // pred_fallthru
        _
      %p1181 = scmp.le.s32.totalorder 2, %s28
      // Predicated region
      $region77: #{tpu_custom_call.1} parent=5 // pred_check
        %p1182 = pneg %p1181
      $region78: #{tpu_custom_call.1} parent=5 // pred_check_branch
        %1184 = sbr.rel (%p1182) target = $region80
      $region79: #{tpu_custom_call.1} parent=5 // pred_region
        %s1185 = ssub.s32 %s28, 2
        // Predicated region
        $region81: #{tpu_custom_call.1} parent=79 // pred_check
          %p1186 = pneg %p309
        $region82: #{tpu_custom_call.1} parent=79 // pred_check_branch
          %1188 = sbr.rel (%p1186) target = $region84
        $region83: #{tpu_custom_call.1} parent=79 // pred_region
          %p1189 = scmp.lt.s32.totalorder %s39, 1
          %s1190 = scalar_select %p1189, %s39, 1
          %p1191 = scmp.lt.s32.totalorder %s40, 0
          %s1192 = scalar_select %p1191, %s40, 0
          %s1193 = smul.addr %s1190, 4
          %s1194 = sadd.s32 %s1192, %s1193
          %s1195 = smul.addr %s1194, 8
          %s1196 = scalar_lea.vmem %s11, %s1195
        $region84: #{tpu_custom_call.1} parent=79 // pred_fallthru
          _
        // Predicated region
        $region85: #{tpu_custom_call.1} parent=79 // pred_check
          %p1197 = pneg %p337
        $region86: #{tpu_custom_call.1} parent=79 // pred_check_branch
          %1199 = sbr.rel (%p1197) target = $region88
        $region87: #{tpu_custom_call.1} parent=79 // pred_region
          %s1200 = sand.u32 %s322, 1
          %s1201 = scalar_lea.sflag [#allocation4], %s1200
          %s1202 = sand.u32 %s322, 1
          %s1203 = smul.addr %s1202, 16
          %s1204 = scalar_lea.vmem [#allocation3], %s1203
          %1205 = dma.done %s1201, 256
        $region88: #{tpu_custom_call.1} parent=79 // pred_fallthru
          _
        // Predicated region
        $region89: #{tpu_custom_call.1} parent=79 // pred_check
          %p1206 = pneg %p365
        $region90: #{tpu_custom_call.1} parent=79 // pred_check_branch
          %1208 = sbr.rel (%p1206) target = $region92
        $region91: #{tpu_custom_call.1} parent=79 // pred_region
          %s1209 = sand.u32 %s350, 1
          %s1210 = scalar_lea.sflag [#allocation6], %s1209
          %s1211 = sand.u32 %s350, 1
          %s1212 = scalar_lea.vmem [#allocation5], %s1211
          %1213 = dma.done %s1210, 16
        $region92: #{tpu_custom_call.1} parent=79 // pred_fallthru
          _
      $region80: #{tpu_custom_call.1} parent=5 // pred_fallthru
        _
    $region6: #{tpu_custom_call.1} parent=1 // loop_footer
      %s32 = sadd.s32 1, %s28
    $region7: #{tpu_custom_call.1} parent=1 // loop_footer_branch
      %27 = sbr.rel target = $region3
    $region8: #{tpu_custom_call.1} parent=1 // loop_exit
      _
    %1214 = vsyncpa [#allocation4], 1
    %s1215 = scalar_lea.sflag [#allocation4], 1
    %1216 = vsyncpa %s1215, 1
    %1217 = vsyncpa [#allocation6], 1
    %s1218 = scalar_lea.sflag [#allocation6], 1
    %1219 = vsyncpa %s1218, 1

</llo_original>
